<compile_context>
chip_gen: v5e
topology: v5e:2x2
jax: 0.10.0
libtpu: 0.0.40
codegen_flags: <defaults>
</compile_context>

<pallas_src>
import jax
import jax.numpy as jnp
from jax.experimental import pallas as pl
from jax.experimental.pallas import tpu as pltpu

D_IN = 384      # fixed by the module (nn.Linear(384, n))
LANE = 128      # TPU lane width  -> pad output features to a multiple of this
SUBLANE = 8     # TPU sublane     -> batch tiles kept as multiples of this
TB_MAX = 512    # large-batch tile (sweep 512/1024 if re-tuning)


def _round_up(x, m):
    return (x + m - 1) // m * m


def linear_kernel(x_ref, w_ref, b_ref, o_ref):
    # x_ref: (TB, 384), w_ref: (384, N_pad), b_ref: (1, N_pad), o_ref: (TB, N_pad)
    acc = jnp.dot(x_ref[...], w_ref[...], preferred_element_type=jnp.float32)
    o_ref[...] = (acc + b_ref[...]).astype(o_ref.dtype)


def prepare_params(weight, bias, dtype=None, pad_bias_value=0.0):
    """One-time parameter prep (call at init, NOT per forward).

    weight: (n, 384) in PyTorch nn.Linear layout; bias: (n,).
    dtype: operand dtype for the MXU (use jnp.bfloat16 when x is bf16 in HBM).
    pad_bias_value: fill for the padded bias columns; use a large negative
      (e.g. -1e30) if consumers will softmax/argmax over the padded slab.
    Returns (w_t_pad, b_pad): weight transposed to (384, N_pad) and bias as
    (1, N_pad) f32, padded so the kernel's output last dim is lane-dense.
    """
    n = weight.shape[0]
    n_pad = _round_up(n, LANE)
    w_dtype = weight.dtype if dtype is None else dtype
    w_t_pad = jnp.zeros((D_IN, n_pad), w_dtype).at[:, :n].set(weight.T.astype(w_dtype))
    b_pad = jnp.full((1, n_pad), pad_bias_value, jnp.float32).at[:, :n].set(
        bias.astype(jnp.float32))
    return w_t_pad, b_pad


def _pick_batch_tile(B):
    if B >= 1024:
        return TB_MAX                               # many tiles, stream through VMEM
    if B >= 256:
        # >= 2 grid steps so v7x's second TensorCore gets work (parallel axis).
        return min(TB_MAX, _round_up(-(-B // 2), SUBLANE))
    return B                                        # single full-array block


def classification_head(x, w_t_pad, b_pad, n, return_padded=False):
    """x: (B, 384); w_t_pad: (384, N_pad); b_pad: (1, N_pad); n: true #classes."""
    B = x.shape[0]
    n_pad = w_t_pad.shape[1]

    TB = _pick_batch_tile(B)
    grid = (pl.cdiv(B, TB),)   # ragged last block handled by Pallas (no jnp.pad)

    itemsize = jnp.dtype(x.dtype).itemsize
    cost = pl.CostEstimate(
        flops=2 * B * D_IN * n_pad,
        transcendentals=0,
        bytes_accessed=(B * D_IN * itemsize
                        + D_IN * n_pad * jnp.dtype(w_t_pad.dtype).itemsize
                        + n_pad * 4
                        + B * n_pad * itemsize),
    )

    out = pl.pallas_call(
        linear_kernel,
        out_shape=jax.ShapeDtypeStruct((B, n_pad), x.dtype),
        grid=grid,
        in_specs=[
            pl.BlockSpec((TB, D_IN), lambda i: (i, 0)),        # x: streamed per tile
            pl.BlockSpec((D_IN, n_pad), lambda i: (0, 0)),     # weight: resident
            pl.BlockSpec((1, n_pad), lambda i: (0, 0)),        # bias: resident
        ],
        out_specs=pl.BlockSpec((TB, n_pad), lambda i: (i, 0)),
        compiler_params=pltpu.CompilerParams(
            dimension_semantics=("parallel",),
        ),
        cost_estimate=cost,
    )(x, w_t_pad, b_pad)

    if return_padded:
        return out           # (B, n_pad) lane-dense slab for downstream fusion
    return out[:, :n]        # exact PyTorch semantics: (B, n)


if __name__ == "__main__":
    key = jax.random.PRNGKey(0)
    k_x, k_w, k_b = jax.random.split(key, 3)

    B = 2          # batch
    D = D_IN       # in_features fixed by the module
    N = 10         # number of classes for this head

    x = jax.random.normal(k_x, (B, D), dtype=jnp.float32)
    # Deterministic init mimicking nn.Linear's uniform(-1/sqrt(D), 1/sqrt(D))
    bound = 1.0 / (D ** 0.5)
    weight = jax.random.uniform(k_w, (N, D), minval=-bound, maxval=bound,
                                dtype=jnp.float32)
    bias = jax.random.uniform(k_b, (N,), minval=-bound, maxval=bound,
                              dtype=jnp.float32)

    # Parameter prep happens once (init time), not per forward call.
    w_t_pad, b_pad = prepare_params(weight, bias)

    out = classification_head(x, w_t_pad, b_pad, N)
    jax.block_until_ready(out)

    # Sanity check against plain-JAX reference of the PyTorch forward.
    ref = x @ weight.T + bias
    assert out.shape == (B, N)
    assert jnp.allclose(out, ref, atol=1e-5, rtol=1e-5)

    print("KERNEL_OK")
</pallas_src>

<mosaic_0001>
module attributes {stable_mosaic.version = 11 : i64} {
  func.func @linear_kernel(%arg0: i32, %arg1: memref<2x384xf32, #tpu.memory_space<vmem>>, %arg2: memref<384x128xf32, #tpu.memory_space<vmem>>, %arg3: memref<1x128xf32, #tpu.memory_space<vmem>>, %arg4: memref<2x128xf32, #tpu.memory_space<vmem>>) attributes {dimension_semantics = [#tpu.dimension_semantics<parallel>], iteration_bounds = array<i64: 1>, scalar_prefetch = 0 : i64, scratch_operands = 0 : i64, tpu.core_type = #tpu.core_type<tc>, window_params = [{transform_indices = @transform_0, window_bounds = array<i64: 2, 384>}, {pipeline_mode = #tpu.pipeline_mode<synchronous>, transform_indices = @transform_1, window_bounds = array<i64: 384, 128>}, {pipeline_mode = #tpu.pipeline_mode<synchronous>, transform_indices = @transform_2, window_bounds = array<i64: 1, 128>}, {transform_indices = @transform_3, window_bounds = array<i64: 2, 128>}]} {
    %c0 = arith.constant 0 : index
    %c0_0 = arith.constant 0 : index
    %0 = vector.load %arg1[%c0, %c0_0] : memref<2x384xf32, #tpu.memory_space<vmem>>, vector<2x384xf32>
    %c0_1 = arith.constant 0 : index
    %c0_2 = arith.constant 0 : index
    %1 = vector.load %arg2[%c0_1, %c0_2] : memref<384x128xf32, #tpu.memory_space<vmem>>, vector<384x128xf32>
    %cst = arith.constant dense<0.000000e+00> : vector<2x128xf32>
    %2 = tpu.matmul %0, %1, %cst {dimension_numbers = #tpu.dot_dimension_numbers<[1], [0], [0], [1], [0, 0, 1, 1], [], []>} : vector<2x384xf32>, vector<384x128xf32>, vector<2x128xf32> -> vector<2x128xf32>
    %c0_3 = arith.constant 0 : index
    %c0_4 = arith.constant 0 : index
    %3 = vector.load %arg3[%c0_3, %c0_4] : memref<1x128xf32, #tpu.memory_space<vmem>>, vector<1x128xf32>
    %4 = vector.broadcast %3 : vector<1x128xf32> to vector<2x128xf32>
    %5 = arith.addf %2, %4 : vector<2x128xf32>
    %c0_5 = arith.constant 0 : index
    %c0_6 = arith.constant 0 : index
    %6 = vector.load %arg4[%c0_5, %c0_6] : memref<2x128xf32, #tpu.memory_space<vmem>>, vector<2x128xf32>
    tpu.vector_store %arg4[%c0_5, %c0_6], %5 {strides = array<i32>} : memref<2x128xf32, #tpu.memory_space<vmem>>, vector<2x128xf32>,
    return
  }
  func.func @transform_0(%arg0: i32) -> (i32, i32) {
    %c0_i32 = arith.constant 0 : i32
    %c0_i32_0 = arith.constant 0 : i32
    return %arg0, %c0_i32 : i32, i32
  }
  func.func @transform_1(%arg0: i32) -> (i32, i32) {
    %c0_i32 = arith.constant 0 : i32
    %c0_i32_0 = arith.constant 0 : i32
    %c0_i32_1 = arith.constant 0 : i32
    return %c0_i32, %c0_i32_0 : i32, i32
  }
  func.func @transform_2(%arg0: i32) -> (i32, i32) {
    %c0_i32 = arith.constant 0 : i32
    %c0_i32_0 = arith.constant 0 : i32
    %c0_i32_1 = arith.constant 0 : i32
    return %c0_i32, %c0_i32_0 : i32, i32
  }
  func.func @transform_3(%arg0: i32) -> (i32, i32) {
    %c0_i32 = arith.constant 0 : i32
    %c0_i32_0 = arith.constant 0 : i32
    return %arg0, %c0_i32 : i32, i32
  }
}

</mosaic_0001>

<llo_original>
// kernel: tpu_custom_call.1
$region0: #{tpu_custom_call.1}
  #allocation0 [shape = 'u32[]', space=smem, size = 0x4, offset = 0x4, fixed_abs, tag = 'smem constant byte address 0x4 - core index']
  #allocation1 [shape = 'u32[72,128]{1,0:T(1,128)}', space=vmem, size = 0x9000, scoped, tag = 'internal scratch']
  %s0 = inlined_call_operand.hbm [shape: f32[2,384], index: 0, kind: input, shape index: {}]
  %s1 = inlined_call_operand.hbm [shape: f32[384,128], index: 1, kind: input, shape index: {}]
  %s2 = inlined_call_operand.vmem [shape: f32[1,128], index: 2, kind: input, shape index: {}]
  %s3 = inlined_call_operand.hbm [shape: f32[2,128], index: 3, kind: output, shape index: {}]
  %s4 = sld [smem:[#allocation0]]
  $region30: #{tpu_custom_call.1} parent=0
    _
  %s6 = ssub.s32 1, %s4
  %s7 = scalar_select 0, %s6, %s4
  $region1: #{tpu_custom_call.1} parent=0
    #allocation2 [shape = 'u8[3072]{0}', space=vmem, size = 0xc00, scoped, tag = 'input window, operand 0, single buffered']
    #allocation3 [shape = 's32[1]{0}', space=sflag, size = 0x4, scoped, tag = 'scoped memory for tpu_custom_call.1']
    #allocation4 [shape = 's32[1]{0}', space=sflag, size = 0x4, scoped, tag = 'scoped memory for tpu_custom_call.1']
    #allocation5 [shape = 'u8[196608]{0}', space=vmem, size = 0x30000, scoped, tag = 'input window, operand 1, single buffered']
    #allocation6 [shape = 's32[1]{0}', space=sflag, size = 0x4, scoped, tag = 'scoped memory for tpu_custom_call.1']
    #allocation7 [shape = 'u8[1024]{0}', space=vmem, size = 0x400, scoped, tag = 'output window, operand 0, single buffered']
    %8 = vsyncpa [#allocation3], 0
    %9 = vsyncpa [#allocation6], 0
    %10 = vsyncpa [#allocation4], 0
    // Predicated region
    $region2: #{tpu_custom_call.1} parent=1 // pred_check
      _
    $region3: #{tpu_custom_call.1} parent=1 // pred_check_branch
      %12 = sbr.rel (0) target = $region5
    $region4: #{tpu_custom_call.1} parent=1 // pred_region
      %14 = vsyncadd [#allocation3], 0
      %s16 = sshll.u32 %s0, 4
      %s17 = int_to_ptr.hbm [resolvable:$true] %s16
      %s18 = sshll.u32 [#allocation2], 4
      %s19 = int_to_ptr.vmem [resolvable:$true] %s18
      %21 = dma.hbm_to_vmem [thread:$0]  %s17, 96, %s19, [#allocation3]
    $region5: #{tpu_custom_call.1} parent=1 // pred_fallthru
      _
    // Predicated region
    $region6: #{tpu_custom_call.1} parent=1 // pred_check
      _
    $region7: #{tpu_custom_call.1} parent=1 // pred_check_branch
      %23 = sbr.rel (0) target = $region9
    $region8: #{tpu_custom_call.1} parent=1 // pred_region
      %25 = vsyncadd [#allocation6], 0
      %s26 = sshll.u32 %s1, 4
      %s27 = int_to_ptr.hbm [resolvable:$true] %s26
      %s28 = sshll.u32 [#allocation5], 4
      %s29 = int_to_ptr.vmem [resolvable:$true] %s28
      %34 = dma.hbm_to_vmem [thread:$0]  %s27, 6144, %s29, [#allocation6], 128, 128, 8
    $region9: #{tpu_custom_call.1} parent=1 // pred_fallthru
      _
    // Predicated region
    $region10: #{tpu_custom_call.1} parent=1 // pred_check
      _
    $region11: #{tpu_custom_call.1} parent=1 // pred_check_branch
      %36 = sbr.rel (0) target = $region13
    $region12: #{tpu_custom_call.1} parent=1 // pred_region
      _
    $region13: #{tpu_custom_call.1} parent=1 // pred_fallthru
      _
    // Predicated region
    $region14: #{tpu_custom_call.1} parent=1 // pred_check
      _
    $region15: #{tpu_custom_call.1} parent=1 // pred_check_branch
      %38 = sbr.rel (0) target = $region17
    $region16: #{tpu_custom_call.1} parent=1 // pred_region
      %40 = dma.done [#allocation3], 96
    $region17: #{tpu_custom_call.1} parent=1 // pred_fallthru
      _
    // Predicated region
    $region18: #{tpu_custom_call.1} parent=1 // pred_check
      _
    $region19: #{tpu_custom_call.1} parent=1 // pred_check_branch
      %42 = sbr.rel (0) target = $region21
    $region20: #{tpu_custom_call.1} parent=1 // pred_region
      %44 = dma.done [#allocation6], 6144
    $region21: #{tpu_custom_call.1} parent=1 // pred_fallthru
      _
    %v45 = vld [vmem:[#allocation2] sm:$0x3f]
    %v46 = vld [vmem:[#allocation5] sm:$0xff]
    %v47 = vld [vmem:[#allocation5 + $0x8] sm:$0xff]
    %v48 = vld [vmem:[#allocation5 + $0x10] sm:$0xff]
    %v49 = vld [vmem:[#allocation5 + $0x18] sm:$0xff]
    %v50 = vld [vmem:[#allocation5 + $0x20] sm:$0xff]
    %v51 = vld [vmem:[#allocation5 + $0x28] sm:$0xff]
    %v52 = vld [vmem:[#allocation5 + $0x30] sm:$0xff]
    %v53 = vld [vmem:[#allocation5 + $0x38] sm:$0xff]
    %v54 = vld [vmem:[#allocation5 + $0x40] sm:$0xff]
    %v55 = vld [vmem:[#allocation5 + $0x48] sm:$0xff]
    %v56 = vld [vmem:[#allocation5 + $0x50] sm:$0xff]
    %v57 = vld [vmem:[#allocation5 + $0x58] sm:$0xff]
    %v58 = vld [vmem:[#allocation5 + $0x60] sm:$0xff]
    %v59 = vld [vmem:[#allocation5 + $0x68] sm:$0xff]
    %v60 = vld [vmem:[#allocation5 + $0x70] sm:$0xff]
    %v61 = vld [vmem:[#allocation5 + $0x78] sm:$0xff]
    %v62 = vld [vmem:[#allocation5 + $0x80] sm:$0xff]
    %v63 = vld [vmem:[#allocation5 + $0x88] sm:$0xff]
    %v64 = vld [vmem:[#allocation5 + $0x90] sm:$0xff]
    %v65 = vld [vmem:[#allocation5 + $0x98] sm:$0xff]
    %v66 = vld [vmem:[#allocation5 + $0xa0] sm:$0xff]
    %v67 = vld [vmem:[#allocation5 + $0xa8] sm:$0xff]
    %v68 = vld [vmem:[#allocation5 + $0xb0] sm:$0xff]
    %v69 = vld [vmem:[#allocation5 + $0xb8] sm:$0xff]
    %v70 = vld [vmem:[#allocation5 + $0xc0] sm:$0xff]
    %v71 = vld [vmem:[#allocation5 + $0xc8] sm:$0xff]
    %v72 = vld [vmem:[#allocation5 + $0xd0] sm:$0xff]
    %v73 = vld [vmem:[#allocation5 + $0xd8] sm:$0xff]
    %v74 = vld [vmem:[#allocation5 + $0xe0] sm:$0xff]
    %v75 = vld [vmem:[#allocation5 + $0xe8] sm:$0xff]
    %v76 = vld [vmem:[#allocation5 + $0xf0] sm:$0xff]
    %v77 = vld [vmem:[#allocation5 + $0xf8] sm:$0xff]
    %v78 = vld [vmem:[#allocation5 + $0x100] sm:$0xff]
    %v79 = vld [vmem:[#allocation5 + $0x108] sm:$0xff]
    %v80 = vld [vmem:[#allocation5 + $0x110] sm:$0xff]
    %v81 = vld [vmem:[#allocation5 + $0x118] sm:$0xff]
    %v82 = vld [vmem:[#allocation5 + $0x120] sm:$0xff]
    %v83 = vld [vmem:[#allocation5 + $0x128] sm:$0xff]
    %v84 = vld [vmem:[#allocation5 + $0x130] sm:$0xff]
    %v85 = vld [vmem:[#allocation5 + $0x138] sm:$0xff]
    %v86 = vld [vmem:[#allocation5 + $0x140] sm:$0xff]
    %v87 = vld [vmem:[#allocation5 + $0x148] sm:$0xff]
    %v88 = vld [vmem:[#allocation5 + $0x150] sm:$0xff]
    %v89 = vld [vmem:[#allocation5 + $0x158] sm:$0xff]
    %v90 = vld [vmem:[#allocation5 + $0x160] sm:$0xff]
    %v91 = vld [vmem:[#allocation5 + $0x168] sm:$0xff]
    %v92 = vld [vmem:[#allocation5 + $0x170] sm:$0xff]
    %v93 = vld [vmem:[#allocation5 + $0x178] sm:$0xff]
    %v94 = vld [vmem:[%s2] sm:$0x1]
    %v96 = vperm.slane %v94, 0
    %99 = vst [vmem:[#allocation1] ss:$4 sm:$0xff] %v45
    %v100 = vld.sshfl [vmem:[#allocation1] sm:$0xff pattern:$0x73625140]
    %v101 = vld.sshfl [vmem:[#allocation1 + $0x8] sm:$0xff pattern:$0x73625140]
    %v102 = vld.sshfl [vmem:[#allocation1 + $0x10] sm:$0xff pattern:$0x73625140]
    %106 = vmatpush.msra.mxu0 %v61
    %107 = vmatpush.msra.mxu0 %v60
    %108 = vmatpush.msra.mxu0 %v59
    %109 = vmatpush.msra.mxu0 %v58
    %110 = vmatpush.msra.mxu0 %v57
    %111 = vmatpush.msra.mxu0 %v56
    %112 = vmatpush.msra.mxu0 %v55
    %113 = vmatpush.msra.mxu0 %v54
    %114 = vmatpush.msra.mxu0 %v53
    %115 = vmatpush.msra.mxu0 %v52
    %116 = vmatpush.msra.mxu0 %v51
    %117 = vmatpush.msra.mxu0 %v50
    %118 = vmatpush.msra.mxu0 %v49
    %119 = vmatpush.msra.mxu0 %v48
    %120 = vmatpush.msra.mxu0 %v47
    %121 = vmatpush.msra.mxu0 %v46
    %122 = vmatmul.f32.gmra.mxu0 %v100
    %v123 = vpop.f32.mrf.mxu0
    %v124 = vadd.f32 %v96, %v123
    %125 = vdwg.mxu0
    %126 = vmatpush.msra.mxu0 %v77
    %127 = vmatpush.msra.mxu0 %v76
    %128 = vmatpush.msra.mxu0 %v75
    %129 = vmatpush.msra.mxu0 %v74
    %130 = vmatpush.msra.mxu0 %v73
    %131 = vmatpush.msra.mxu0 %v72
    %132 = vmatpush.msra.mxu0 %v71
    %133 = vmatpush.msra.mxu0 %v70
    %134 = vmatpush.msra.mxu0 %v69
    %135 = vmatpush.msra.mxu0 %v68
    %136 = vmatpush.msra.mxu0 %v67
    %137 = vmatpush.msra.mxu0 %v66
    %138 = vmatpush.msra.mxu0 %v65
    %139 = vmatpush.msra.mxu0 %v64
    %140 = vmatpush.msra.mxu0 %v63
    %141 = vmatpush.msra.mxu0 %v62
    %142 = vmatmul.f32.gmra.mxu0 %v101
    %v143 = vpop.f32.mrf.mxu0
    %v144 = vadd.f32 %v124, %v143
    %145 = vdwg.mxu0
    %146 = vmatpush.msra.mxu0 %v93
    %147 = vmatpush.msra.mxu0 %v92
    %148 = vmatpush.msra.mxu0 %v91
    %149 = vmatpush.msra.mxu0 %v90
    %150 = vmatpush.msra.mxu0 %v89
    %151 = vmatpush.msra.mxu0 %v88
    %152 = vmatpush.msra.mxu0 %v87
    %153 = vmatpush.msra.mxu0 %v86
    %154 = vmatpush.msra.mxu0 %v85
    %155 = vmatpush.msra.mxu0 %v84
    %156 = vmatpush.msra.mxu0 %v83
    %157 = vmatpush.msra.mxu0 %v82
    %158 = vmatpush.msra.mxu0 %v81
    %159 = vmatpush.msra.mxu0 %v80
    %160 = vmatpush.msra.mxu0 %v79
    %161 = vmatpush.msra.mxu0 %v78
    %162 = vmatmul.f32.gmra.mxu0 %v102
    %v163 = vpop.f32.mrf.mxu0
    %v164 = vadd.f32 %v144, %v163
    %165 = vdwg.mxu0
    %166 = vst [vmem:[#allocation7] sm:$0x3] %v164
    // Predicated region
    $region22: #{tpu_custom_call.1} parent=1 // pred_check
      _
    $region23: #{tpu_custom_call.1} parent=1 // pred_check_branch
      %168 = sbr.rel (0) target = $region25
    $region24: #{tpu_custom_call.1} parent=1 // pred_region
      %170 = vsyncadd [#allocation4], 0
      %s172 = sshll.u32 [#allocation7], 4
      %s173 = int_to_ptr.vmem [resolvable:$true] %s172
      %s174 = sshll.u32 %s3, 4
      %s175 = int_to_ptr.hbm [resolvable:$true] %s174
      %177 = dma.vmem_to_hbm [thread:$0]  %s173, 32, %s175, [#allocation4]
    $region25: #{tpu_custom_call.1} parent=1 // pred_fallthru
      _
    // Predicated region
    $region26: #{tpu_custom_call.1} parent=1 // pred_check
      _
    $region27: #{tpu_custom_call.1} parent=1 // pred_check_branch
      %179 = sbr.rel (0) target = $region29
    $region28: #{tpu_custom_call.1} parent=1 // pred_region
      %181 = dma.done [#allocation4], 32
    $region29: #{tpu_custom_call.1} parent=1 // pred_fallthru
      _
    %182 = vsyncpa [#allocation3], 1
    %183 = vsyncpa [#allocation6], 1
    %184 = vsyncpa [#allocation4], 1

</llo_original>
